<compile_context>
chip_gen: v7x
topology: tpu7x:2x2x1
jax: 0.10.0
libtpu: 0.0.40
codegen_flags: <defaults>
</compile_context>

<pallas_src>
import jax
import jax.numpy as jnp
from jax.experimental import pallas as pl
from jax.experimental.pallas import tpu as pltpu


def _identity_kernel(x_ref, o_ref):
    # Pure element copy (identity). Whole tile is moved through VMEM.
    o_ref[...] = x_ref[...]


def _sublane_multiple(dtype) -> int:
    # Sub-32-bit dtypes pack along sublanes: minimum second-to-last block dim
    # is 8 for 4-byte, 16 for 2-byte, 32 for 1-byte dtypes.
    itemsize = jnp.dtype(dtype).itemsize
    return max(8, 32 // max(itemsize, 1))


def _round_up(x: int, m: int) -> int:
    return ((x + m - 1) // m) * m


def lstm_sentence_encoder_forward(x, *, target_tile_bytes: int = 4 << 20):
    """Identity forward matching LSTMSentenceEncoder.forward(inputs) -> inputs."""
    orig_shape = x.shape

    # Flatten to 2D [rows, cols]; the last dim maps to TPU lanes.
    if x.ndim == 0:
        x2 = x.reshape(1, 1)
    elif x.ndim == 1:
        x2 = x.reshape(1, -1)
    else:
        x2 = x.reshape(-1, x.shape[-1])
    rows, cols = x2.shape

    itemsize = jnp.dtype(x2.dtype).itemsize
    sub = _sublane_multiple(x2.dtype)

    # Rows covered by one ~target_tile_bytes full-width tile, rounded down to
    # the sublane packing multiple, clamped to [sub, rows rounded up to sub].
    row_bytes = max(cols * itemsize, 1)
    tile_rows = max(sub, (target_tile_bytes // row_bytes) // sub * sub)
    tile_rows = min(tile_rows, _round_up(rows, sub))

    grid = (pl.cdiv(rows, tile_rows),)

    # Scoped-VMEM budget: 2 double-buffered input tiles + 2 output tiles,
    # plus headroom. Stays well under v5e/v6e/v7x limits for a 4 MiB tile cap.
    tile_bytes = tile_rows * cols * itemsize
    vmem_limit = int(min(max(4 * tile_bytes + (2 << 20), 8 << 20), 48 << 20))

    out = pl.pallas_call(
        _identity_kernel,
        out_shape=jax.ShapeDtypeStruct((rows, cols), x2.dtype),
        grid_spec=pltpu.PrefetchScalarGridSpec(
            num_scalar_prefetch=0,
            grid=grid,
            in_specs=[pl.BlockSpec((tile_rows, cols), lambda i: (i, 0))],
            out_specs=pl.BlockSpec((tile_rows, cols), lambda i: (i, 0)),
        ),
        compiler_params=pltpu.CompilerParams(
            dimension_semantics=("parallel",),  # row tiles shard across TCs (v7x)
            vmem_limit_bytes=vmem_limit,
        ),
        input_output_aliases={0: 0},  # reuse the input HBM buffer for the output
    )(x2)

    return out.reshape(orig_shape)


if __name__ == "__main__":
    key = jax.random.PRNGKey(0)

    # Shapes consistent with a sentence encoder input: [batch, seq, hidden].
    batch, seq, hidden = 2, 8, 32
    x = jax.random.normal(key, (batch, seq, hidden), dtype=jnp.float32)

    y = lstm_sentence_encoder_forward(x)
    y = jax.block_until_ready(y)

    assert y.shape == x.shape and y.dtype == x.dtype
    assert bool(jnp.all(y == x))

    # Second check: sub-32-bit dtype + ragged (non-8/128-aligned) shape, which
    # exercises the dtype-aware tile_rows and the no-pad ragged-edge path.
    xb = jax.random.normal(jax.random.PRNGKey(0), (3, 5, 33), dtype=jnp.bfloat16)
    yb = jax.block_until_ready(lstm_sentence_encoder_forward(xb))
    assert yb.shape == xb.shape and yb.dtype == xb.dtype
    assert bool(jnp.all(yb == xb))

    print("KERNEL_OK")
</pallas_src>

<mosaic_0001>
module attributes {stable_mosaic.version = 11 : i64} {
  func.func @_identity_kernel(%arg0: i32, %arg1: memref<16x32xf32, #tpu.memory_space<vmem>>, %arg2: memref<16x32xf32, #tpu.memory_space<vmem>>) attributes {dimension_semantics = [#tpu.dimension_semantics<parallel>], iteration_bounds = array<i64: 1>, scalar_prefetch = 0 : i64, scratch_operands = 0 : i64, tpu.core_type = #tpu.core_type<tc>, window_params = [{transform_indices = @transform_0, window_bounds = array<i64: 16, 32>}, {transform_indices = @transform_1, window_bounds = array<i64: 16, 32>}]} {
    %c0 = arith.constant 0 : index
    %c0_0 = arith.constant 0 : index
    %0 = vector.load %arg1[%c0, %c0_0] : memref<16x32xf32, #tpu.memory_space<vmem>>, vector<16x32xf32>
    %c0_1 = arith.constant 0 : index
    %c0_2 = arith.constant 0 : index
    %1 = vector.load %arg2[%c0_1, %c0_2] : memref<16x32xf32, #tpu.memory_space<vmem>>, vector<16x32xf32>
    tpu.vector_store %arg2[%c0_1, %c0_2], %0 {strides = array<i32>} : memref<16x32xf32, #tpu.memory_space<vmem>>, vector<16x32xf32>,
    return
  }
  func.func @transform_0(%arg0: i32) -> (i32, i32) {
    %c0_i32 = arith.constant 0 : i32
    %c0_i32_0 = arith.constant 0 : i32
    return %arg0, %c0_i32 : i32, i32
  }
  func.func @transform_1(%arg0: i32) -> (i32, i32) {
    %c0_i32 = arith.constant 0 : i32
    %c0_i32_0 = arith.constant 0 : i32
    return %arg0, %c0_i32 : i32, i32
  }
}

</mosaic_0001>

<llo_original>
// kernel: tpu_custom_call.1
$region0: #{tpu_custom_call.1}
  #allocation0 [shape = 'u32[]', space=smem, size = 0x4, offset = 0x4, fixed_abs, tag = 'smem constant byte address 0x4 - core index']
  #allocation1 [shape = 'u32[144,128]{1,0:T(1,128)}', space=vmem, size = 0x12000, scoped, tag = 'internal scratch']
  %s0 = inlined_call_operand.hbm [shape: f32[16,32], index: 0, kind: input, shape index: {}, may-alias: {0,1}]
  %s1 = inlined_call_operand.hbm [shape: f32[16,32], index: 1, kind: output, shape index: {}, may-alias: {0,1}]
  %s2 = sld [smem:[#allocation0]]
  $region18: #{tpu_custom_call.1} parent=0
    _
  %s4 = ssub.s32 1, %s2
  %s5 = scalar_select 0, %s4, %s2
  $region1: #{tpu_custom_call.1} parent=0
    #allocation2 [shape = 'u8[8192]{0}', space=vmem, size = 0x2000, scoped, tag = 'input window, operand 0, single buffered']
    #allocation3 [shape = 's32[1]{0}', space=sflag, size = 0x4, scoped, tag = 'scoped memory for tpu_custom_call.1']
    #allocation4 [shape = 's32[1]{0}', space=sflag, size = 0x4, scoped, tag = 'scoped memory for tpu_custom_call.1']
    #allocation5 [shape = 'u8[8192]{0}', space=vmem, size = 0x2000, scoped, tag = 'output window, operand 0, single buffered']
    %6 = vsyncpa [#allocation3], 0
    %7 = vsyncpa [#allocation4], 0
    // Predicated region
    $region2: #{tpu_custom_call.1} parent=1 // pred_check
      _
    $region3: #{tpu_custom_call.1} parent=1 // pred_check_branch
      %9 = sbr.rel (0) target = $region5
    $region4: #{tpu_custom_call.1} parent=1 // pred_region
      %s11 = ssub.s32 256, 256
      %12 = vsyncadd [#allocation3], %s11
      %s13 = sshll.u32 [#allocation2], 4
      %s14 = int_to_ptr.vmem [resolvable:$true] %s13
      %19 = dma.hbm_to_vmem [thread:$0]  %s0, 256, %s14, [#allocation3], 128, 128, 8
    $region5: #{tpu_custom_call.1} parent=1 // pred_fallthru
      _
    // Predicated region
    $region6: #{tpu_custom_call.1} parent=1 // pred_check
      _
    $region7: #{tpu_custom_call.1} parent=1 // pred_check_branch
      %21 = sbr.rel (0) target = $region9
    $region8: #{tpu_custom_call.1} parent=1 // pred_region
      %22 = dma.done [#allocation3], 256
    $region9: #{tpu_custom_call.1} parent=1 // pred_fallthru
      _
    %v23 = vld [vmem:[#allocation2] sm:$0xff]
    %v24 = vld [vmem:[#allocation2 + $0x8] sm:$0xff]
    %vm25 = vcmask 261120
    %26 = vst.msk [vmem:[#allocation5] sm:$0xff] %vm25, %v23
    %27 = vst.msk [vmem:[#allocation5 + $0x8] sm:$0xff] %vm25, %v24
    // Predicated region
    $region10: #{tpu_custom_call.1} parent=1 // pred_check
      _
    $region11: #{tpu_custom_call.1} parent=1 // pred_check_branch
      %29 = sbr.rel (0) target = $region13
    $region12: #{tpu_custom_call.1} parent=1 // pred_region
      %s31 = ssub.s32 256, 256
      %32 = vsyncadd [#allocation4], %s31
      %s33 = sshll.u32 [#allocation5], 4
      %s34 = int_to_ptr.vmem [resolvable:$true] %s33
      %39 = dma.vmem_to_hbm [thread:$0]  %s34, 256, %s1, [#allocation4], 128, 128, 8
    $region13: #{tpu_custom_call.1} parent=1 // pred_fallthru
      _
    // Predicated region
    $region14: #{tpu_custom_call.1} parent=1 // pred_check
      _
    $region15: #{tpu_custom_call.1} parent=1 // pred_check_branch
      %41 = sbr.rel (0) target = $region17
    $region16: #{tpu_custom_call.1} parent=1 // pred_region
      %42 = dma.done [#allocation4], 256
    $region17: #{tpu_custom_call.1} parent=1 // pred_fallthru
      _
    %43 = vsyncpa [#allocation3], 1
    %44 = vsyncpa [#allocation4], 1

</llo_original>
